<compile_context>
chip_gen: v7x
topology: tpu7x:2x2x1
jax: 0.10.0
libtpu: 0.0.40
codegen_flags: <defaults>
</compile_context>

<pallas_src>
import jax
import jax.numpy as jnp
from jax.experimental import pallas as pl
from jax.experimental.pallas import tpu as pltpu

_LANE = 128   # vreg lane width


def _round_up(a, m):
    return ((a + m - 1) // m) * m


def _linear_kernel(params_ref, x_ref, o_ref):
    # params_ref: (3,) f32 in SMEM -> [w0, w1, b]
    # x_ref:      (tile_rows, 128) in VMEM, feature-interleaved along lanes
    #             (lane 2k = x0 of a sample, lane 2k+1 = x1 of the same sample)
    # o_ref:      (tile_rows, 128) in VMEM; even lanes hold y, odd lanes are
    #             don't-care (wrapper extracts column 0 of the (b_pad, 2) view)
    w0 = params_ref[0]
    w1 = params_ref[1]
    b = params_ref[2]

    # Per-lane weight pattern [w0, w1, w0, w1, ...] via lane-parity iota (VPU).
    lane = jax.lax.broadcasted_iota(jnp.int32, (1, _LANE), 1)
    w_lane = jnp.where(lane % 2 == 0, w0, w1)            # (1, 128) f32

    p = x_ref[...] * w_lane                               # VPU multiply
    # Pair-sum: add lane 2k+1 into lane 2k.  A lane roll of 127 == -1 (mod 128)
    # brings each odd lane's value onto its even partner.  XLU op; the XLU slot
    # is completely idle in this DMA-bound kernel.
    s = p + pltpu.roll(p, _LANE - 1, 1)                   # roll(x, shift, axis)
    o_ref[...] = (s + b).astype(o_ref.dtype)


def linear_forward(x, weight, bias, *, tile_rows=8192, out_dtype=None):
    """Forward pass of nn.Linear(2, 1).

    x:      (B, 2)  f32
    weight: (1, 2)  f32 (PyTorch layout)
    bias:   (1,)    f32
    returns (B, 1)  in out_dtype (default: x.dtype)
    """
    B, in_f = x.shape
    out_f = weight.shape[0]
    assert in_f == 2 and out_f == 1
    out_dtype = jnp.dtype(out_dtype or x.dtype)

    # Pack the 3 parameters into a single SMEM-resident vector [w0, w1, b].
    params = jnp.concatenate(
        [weight.reshape(-1), bias.reshape(-1)]).astype(jnp.float32)

    # Sublane quantum (f32: 8, bf16: 16) for the (8/16, 128) min-tile rule.
    itemsize_min = min(jnp.dtype(x.dtype).itemsize, out_dtype.itemsize)
    sub = 8 * max(1, 4 // itemsize_min)

    # --- Tiling of the interleaved (rows, 128) slab -------------------------
    n = 2 * B                                           # flattened element count
    rows_min = _round_up(pl.cdiv(n, _LANE), sub)        # rows needed, sub-aligned
    tr_target = _round_up(min(max(int(tile_rows), sub), 16384), sub)
    g = max(1, pl.cdiv(rows_min, tr_target))            # number of grid steps
    if rows_min >= 2 * sub:
        g = max(g, 2)      # keep >= 2 steps so v7x's two TensorCores both engage
    tr = _round_up(pl.cdiv(rows_min, g), sub)           # round the tile *up*
    rows = g * tr                                       # padded row count
    n_pad = rows * _LANE

    # Free re-chop of the native (B, 2) layout; the pad only copies when B is
    # ragged (padded tail evaluates to `b` in the slab and is sliced off below).
    xf = x.reshape(-1)
    if n_pad != n:
        xf = jnp.pad(xf, (0, n_pad - n))
    xi = xf.reshape(rows, _LANE)

    # Explicit scoped-VMEM budget: double-buffered in + out tiles plus margin.
    # (Requesting 32 MiB is safe on v5e/v6e/v7x; default tiles need ~16 MiB.)
    in_bytes = tr * _LANE * jnp.dtype(x.dtype).itemsize
    out_bytes = tr * _LANE * out_dtype.itemsize
    vmem_limit = int(max(2 * (in_bytes + out_bytes) + (2 << 20), 32 << 20))

    out = pl.pallas_call(
        _linear_kernel,
        out_shape=jax.ShapeDtypeStruct((rows, _LANE), out_dtype),
        grid_spec=pltpu.PrefetchScalarGridSpec(
            num_scalar_prefetch=0,
            grid=(g,),
            in_specs=[
                # 3 floats of parameters, whole array in SMEM (no VMEM DMA).
                pl.BlockSpec(memory_space=pltpu.MemorySpace.SMEM),
                # Batch-tiled, lane-dense, feature-interleaved input slab.
                pl.BlockSpec((tr, _LANE), lambda i: (i, 0)),
            ],
            out_specs=pl.BlockSpec((tr, _LANE), lambda i: (i, 0)),
        ),
        compiler_params=pltpu.CompilerParams(
            dimension_semantics=("parallel",),   # v7x: 2 TCs split the batch
            vmem_limit_bytes=vmem_limit),
    )(params, xi)

    # y of sample s sits at flat position 2*s (even lane).  The reshape is
    # free; the column-0 slice is the only remaining glue copy.  Callers that
    # can consume the padded (n_pad//2, 2) slab directly can skip it.
    return out.reshape(n_pad // 2, 2)[:B, :1]


if __name__ == "__main__":
    key = jax.random.PRNGKey(0)
    kx, kw, kb = jax.random.split(key, 3)

    B, IN_F, OUT_F = 8, 2, 1
    x = jax.random.normal(kx, (B, IN_F), dtype=jnp.float32)

    # Deterministic init mimicking nn.Linear's U(-1/sqrt(fan_in), 1/sqrt(fan_in))
    bound = 1.0 / jnp.sqrt(jnp.float32(IN_F))
    weight = jax.random.uniform(kw, (OUT_F, IN_F), jnp.float32, -bound, bound)
    bias = jax.random.uniform(kb, (OUT_F,), jnp.float32, -bound, bound)

    # Primary check: module-sized batch.
    out = jax.block_until_ready(linear_forward(x, weight, bias))
    ref = x @ weight.T + bias
    assert out.shape == (B, OUT_F)
    assert jnp.allclose(out, ref, atol=1e-5, rtol=1e-5)

    # Secondary check: ragged batch (exercises flat padding + slice-back).
    B2 = 300
    x2 = jax.random.normal(kx, (B2, IN_F), dtype=jnp.float32)
    out2 = jax.block_until_ready(linear_forward(x2, weight, bias))
    assert jnp.allclose(out2, x2 @ weight.T + bias, atol=1e-5, rtol=1e-5)

    # Tertiary check: multi-step pipelined grid (tile_rows=8 -> grid=(8,)).
    B3 = 4096
    x3 = jax.random.normal(kw, (B3, IN_F), dtype=jnp.float32)
    out3 = jax.block_until_ready(linear_forward(x3, weight, bias, tile_rows=8))
    assert jnp.allclose(out3, x3 @ weight.T + bias, atol=1e-5, rtol=1e-5)

    print("KERNEL_OK")
</pallas_src>

<mosaic_0001>
module attributes {stable_mosaic.version = 11 : i64} {
  func.func @_linear_kernel(%arg0: i32, %arg1: memref<3xf32, #tpu.memory_space<smem>>, %arg2: memref<8x128xf32, #tpu.memory_space<vmem>>, %arg3: memref<8x128xf32, #tpu.memory_space<vmem>>) attributes {dimension_semantics = [#tpu.dimension_semantics<parallel>], iteration_bounds = array<i64: 1>, scalar_prefetch = 0 : i64, scratch_operands = 0 : i64, tpu.core_type = #tpu.core_type<tc>, window_params = [{transform_indices = @transform_0, window_bounds = array<i64: 3>}, {transform_indices = @transform_1, window_bounds = array<i64: 8, 128>}, {transform_indices = @transform_2, window_bounds = array<i64: 8, 128>}]} {
    %c0 = arith.constant 0 : index
    %0 = memref.load %arg1[%c0] : memref<3xf32, #tpu.memory_space<smem>>
    %c1 = arith.constant 1 : index
    %1 = memref.load %arg1[%c1] : memref<3xf32, #tpu.memory_space<smem>>
    %c2 = arith.constant 2 : index
    %2 = memref.load %arg1[%c2] : memref<3xf32, #tpu.memory_space<smem>>
    %3 = tpu.iota {dimensions = array<i32: 1>} : vector<1x128xi32>
    %c2_i32 = arith.constant 2 : i32
    %c0_i32 = arith.constant 0 : i32
    %4 = arith.cmpi eq, %c2_i32, %c0_i32 : i32
    %c1_i32 = arith.constant 1 : i32
    %5 = arith.select %4, %c1_i32, %c2_i32 : i32
    %6 = vector.broadcast %5 : i32 to vector<1x128xi32>
    %7 = arith.remsi %3, %6 : vector<1x128xi32>
    %c0_i32_0 = arith.constant 0 : i32
    %8 = vector.broadcast %c0_i32_0 : i32 to vector<1x128xi32>
    %9 = arith.cmpi ne, %7, %8 : vector<1x128xi32>
    %c0_i32_1 = arith.constant 0 : i32
    %10 = vector.broadcast %c0_i32_1 : i32 to vector<1x128xi32>
    %11 = arith.cmpi slt, %7, %10 : vector<1x128xi32>
    %c0_i32_2 = arith.constant 0 : i32
    %12 = arith.cmpi slt, %5, %c0_i32_2 : i32
    %13 = vector.broadcast %12 : i1 to vector<1x128xi1>
    %14 = vector.broadcast %13 : vector<1x128xi1> to vector<1x128xi1>
    %15 = arith.xori %11, %14 : vector<1x128xi1>
    %16 = arith.andi %15, %9 : vector<1x128xi1>
    %17 = vector.broadcast %5 : i32 to vector<1x128xi32>
    %18 = arith.addi %7, %17 : vector<1x128xi32>
    %19 = arith.select %16, %18, %7 : vector<1x128xi1>, vector<1x128xi32>
    %c0_i32_3 = arith.constant 0 : i32
    %20 = vector.broadcast %c0_i32_3 : i32 to vector<1x128xi32>
    %21 = arith.cmpi eq, %19, %20 : vector<1x128xi32>
    %22 = vector.broadcast %0 : f32 to vector<1x128xf32>
    %23 = vector.broadcast %1 : f32 to vector<1x128xf32>
    %24 = arith.select %21, %22, %23 : vector<1x128xi1>, vector<1x128xf32>
    %c0_4 = arith.constant 0 : index
    %c0_5 = arith.constant 0 : index
    %25 = vector.load %arg2[%c0_4, %c0_5] : memref<8x128xf32, #tpu.memory_space<vmem>>, vector<8x128xf32>
    %26 = vector.broadcast %24 : vector<1x128xf32> to vector<8x128xf32>
    %27 = arith.mulf %25, %26 : vector<8x128xf32>
    %c127_i32 = arith.constant 127 : i32
    %28 = tpu.dynamic_rotate %27 by %c127_i32 dim 1 : vector<8x128xf32>, i32 -> vector<8x128xf32>
    %29 = arith.addf %27, %28 : vector<8x128xf32>
    %30 = vector.broadcast %2 : f32 to vector<8x128xf32>
    %31 = arith.addf %29, %30 : vector<8x128xf32>
    %c0_6 = arith.constant 0 : index
    %c0_7 = arith.constant 0 : index
    %32 = vector.load %arg3[%c0_6, %c0_7] : memref<8x128xf32, #tpu.memory_space<vmem>>, vector<8x128xf32>
    tpu.vector_store %arg3[%c0_6, %c0_7], %31 {strides = array<i32>} : memref<8x128xf32, #tpu.memory_space<vmem>>, vector<8x128xf32>,
    return
  }
  func.func @transform_0(%arg0: i32) -> i32 {
    %c0_i32 = arith.constant 0 : i32
    %c0_i32_0 = arith.constant 0 : i32
    return %c0_i32 : i32
  }
  func.func @transform_1(%arg0: i32) -> (i32, i32) {
    %c0_i32 = arith.constant 0 : i32
    %c0_i32_0 = arith.constant 0 : i32
    return %arg0, %c0_i32 : i32, i32
  }
  func.func @transform_2(%arg0: i32) -> (i32, i32) {
    %c0_i32 = arith.constant 0 : i32
    %c0_i32_0 = arith.constant 0 : i32
    return %arg0, %c0_i32 : i32, i32
  }
}

</mosaic_0001>

<llo_original>
// kernel: tpu_custom_call.1
$region0: #{tpu_custom_call.1}
  #allocation0 [shape = 'u32[]', space=smem, size = 0x4, offset = 0x4, fixed_abs, tag = 'smem constant byte address 0x4 - core index']
  #allocation1 [shape = 'u32[144,128]{1,0:T(1,128)}', space=vmem, size = 0x12000, scoped, tag = 'internal scratch']
  %s0 = inlined_call_operand.hbm [shape: f32[3], index: 0, kind: input, shape index: {}]
  %s1 = inlined_call_operand.hbm [shape: f32[8,128], index: 1, kind: input, shape index: {}]
  %s2 = inlined_call_operand.hbm [shape: f32[8,128], index: 2, kind: output, shape index: {}]
  %s3 = sld [smem:[#allocation0]]
  $region26: #{tpu_custom_call.1} parent=0
    _
  %s5 = ssub.s32 1, %s3
  %s6 = scalar_select 0, %s5, %s3
  $region1: #{tpu_custom_call.1} parent=0
    #allocation2 [shape = 'u8[512]{0}', space=smem, size = 0x200, scoped, tag = 'input window, operand 0, single buffered']
    #allocation3 [shape = 's32[1]{0}', space=sflag, size = 0x4, scoped, tag = 'scoped memory for tpu_custom_call.1']
    #allocation4 [shape = 's32[1]{0}', space=sflag, size = 0x4, scoped, tag = 'scoped memory for tpu_custom_call.1']
    #allocation5 [shape = 's32[1]{0}', space=sflag, size = 0x4, scoped, tag = 'scoped memory for tpu_custom_call.1']
    #allocation6 [shape = 'u8[4096]{0}', space=vmem, size = 0x1000, scoped, tag = 'input window, operand 1, single buffered']
    #allocation7 [shape = 'u8[4096]{0}', space=vmem, size = 0x1000, scoped, tag = 'output window, operand 0, single buffered']
    %7 = vsyncpa [#allocation5], 0
    %8 = vsyncpa [#allocation3], 0
    %9 = vsyncpa [#allocation4], 0
    // Predicated region
    $region2: #{tpu_custom_call.1} parent=1 // pred_check
      _
    $region3: #{tpu_custom_call.1} parent=1 // pred_check_branch
      %11 = sbr.rel (0) target = $region5
    $region4: #{tpu_custom_call.1} parent=1 // pred_region
      %s13 = ssub.s32 16, 16
      %14 = vsyncadd [#allocation5], %s13
      %17 = dma.hbm_to_smem %s0, 16, [#allocation2], [#allocation5]
    $region5: #{tpu_custom_call.1} parent=1 // pred_fallthru
      _
    // Predicated region
    $region6: #{tpu_custom_call.1} parent=1 // pred_check
      _
    $region7: #{tpu_custom_call.1} parent=1 // pred_check_branch
      %19 = sbr.rel (0) target = $region9
    $region8: #{tpu_custom_call.1} parent=1 // pred_region
      %s21 = ssub.s32 128, 128
      %22 = vsyncadd [#allocation3], %s21
      %s24 = sshll.u32 [#allocation6], 4
      %s25 = int_to_ptr.vmem [resolvable:$true] %s24
      %27 = dma.hbm_to_vmem [thread:$0]  %s1, 128, %s25, [#allocation3]
    $region9: #{tpu_custom_call.1} parent=1 // pred_fallthru
      _
    // Predicated region
    $region10: #{tpu_custom_call.1} parent=1 // pred_check
      _
    $region11: #{tpu_custom_call.1} parent=1 // pred_check_branch
      %29 = sbr.rel (0) target = $region13
    $region12: #{tpu_custom_call.1} parent=1 // pred_region
      %30 = dma.done [#allocation5], 16
    $region13: #{tpu_custom_call.1} parent=1 // pred_fallthru
      _
    // Predicated region
    $region14: #{tpu_custom_call.1} parent=1 // pred_check
      _
    $region15: #{tpu_custom_call.1} parent=1 // pred_check_branch
      %32 = sbr.rel (0) target = $region17
    $region16: #{tpu_custom_call.1} parent=1 // pred_region
      %33 = dma.done [#allocation3], 128
    $region17: #{tpu_custom_call.1} parent=1 // pred_fallthru
      _
    %34 = sfence
    %s35 = sld [smem:[#allocation2]]
    %s36 = sld [smem:[#allocation2 + $0x1]]
    %s37 = sld [smem:[#allocation2 + $0x2]]
    %v38 = vlaneseq
    %v39 = vand.u32 %v38, 127
    %vm40 = vcmp.lt.s32.totalorder %v39, 0
    %v41 = vsub.s32 0, %v39
    %v42 = vsel %vm40, %v41, %v39
    %v43 = vshrl.u32 %v42, 1
    %v44 = vand.u32 %v42, 1
    %v45 = vsub.s32 0, %v44
    %v46 = vsel %vm40, %v45, %v44
    %vm47 = vcmp.ne.s32.totalorder %v46, 0
    %vm48 = vcmp.lt.s32.totalorder %v46, 0
    %vm49 = vmand %vm48, %vm47
    %v50 = vadd.s32 %v46, 2
    %v51 = vsel %vm49, %v50, %v46
    %vm52 = vcmp.eq.s32.totalorder %v51, 0
    %v53 = vstv %s35
    %v54 = vstv %s36
    %v55 = vsel %vm52, %v53, %v54
    %v56 = vld [vmem:[#allocation6] sm:$0xff]
    %v57 = vmul.f32 %v56, %v55
    %58 = vrot.lane.b32.xlu0 %v57, 127
    %v59 = vpop.permute.xlu0 %58
    %v60 = vadd.f32 %v57, %v59
    %v61 = vstv %s37
    %v62 = vadd.f32 %v60, %v61
    %63 = vst [vmem:[#allocation7] sm:$0xff] %v62
    // Predicated region
    $region18: #{tpu_custom_call.1} parent=1 // pred_check
      _
    $region19: #{tpu_custom_call.1} parent=1 // pred_check_branch
      %65 = sbr.rel (0) target = $region21
    $region20: #{tpu_custom_call.1} parent=1 // pred_region
      %s67 = ssub.s32 128, 128
      %68 = vsyncadd [#allocation4], %s67
      %s70 = sshll.u32 [#allocation7], 4
      %s71 = int_to_ptr.vmem [resolvable:$true] %s70
      %73 = dma.vmem_to_hbm [thread:$0]  %s71, 128, %s2, [#allocation4]
    $region21: #{tpu_custom_call.1} parent=1 // pred_fallthru
      _
    // Predicated region
    $region22: #{tpu_custom_call.1} parent=1 // pred_check
      _
    $region23: #{tpu_custom_call.1} parent=1 // pred_check_branch
      %75 = sbr.rel (0) target = $region25
    $region24: #{tpu_custom_call.1} parent=1 // pred_region
      %76 = dma.done [#allocation4], 128
    $region25: #{tpu_custom_call.1} parent=1 // pred_fallthru
      _
    %77 = vsyncpa [#allocation3], 1
    %78 = vsyncpa [#allocation4], 1
    %79 = vsyncpa [#allocation5], 1

</llo_original>
